<compile_context>
chip_gen: v6e
topology: v6e:2x2x1
jax: 0.10.0
libtpu: 0.0.40
codegen_flags: <defaults>
</compile_context>

<pallas_src>
import functools

import numpy as np
import jax
import jax.numpy as jnp
from jax.experimental import pallas as pl
from jax.experimental.pallas import tpu as pltpu


def _latent_decoder_kernel(z_ref, y_ref,
                           w1_ref, b1_ref, w2_ref, b2_ref,
                           w3_ref, b3_ref, e2_ref, out_ref):
    """Packed 3-layer MLP (all clusters at once) with the y-mixture folded into
    the final matmul. MXU operands are bf16; accumulation / elementwise in f32."""
    # Layer 1: Linear + ReLU                      -> [bt, n_y*h1]
    h = jnp.dot(z_ref[...], w1_ref[...],
                preferred_element_type=jnp.float32) + b1_ref[...]
    h = jnp.maximum(h, 0.0)

    # Layer 2: Linear + ReLU (block-diag == per-cluster)   -> [bt, n_y*h2]
    h = jnp.dot(h.astype(jnp.bfloat16), w2_ref[...],
                preferred_element_type=jnp.float32) + b2_ref[...]
    h = jnp.maximum(h, 0.0)

    # y-mixture folded into the output layer:
    #   y_exp[b, k*h2 + m] = y[b, k]
    #   out[b, j] = sum_{k,m} y[b,k] * h2_k[b,m] * W3_k[m,j] + sum_k y[b,k]*b3_k[j]
    y_exp = jnp.dot(y_ref[...], e2_ref[...], preferred_element_type=jnp.float32)
    h = h * y_exp
    out = jnp.dot(h.astype(jnp.bfloat16), w3_ref[...],
                  preferred_element_type=jnp.float32)
    out = out + jnp.dot(y_ref[...], b3_ref[...],
                        preferred_element_type=jnp.float32)
    out_ref[...] = out


def _pack_params(params, n_x_pad):
    """Pack the n_y per-cluster MLPs into lane-dense matrices (bf16 weights)."""
    w1, b1 = params["w1"], params["b1"]   # [n_y, n_z, h1], [n_y, h1]
    w2, b2 = params["w2"], params["b2"]   # [n_y, h1, h2], [n_y, h2]
    w3, b3 = params["w3"], params["b3"]   # [n_y, h2, n_x], [n_y, n_x]
    n_y, n_z, h1 = w1.shape
    h2 = w2.shape[2]
    n_x = w3.shape[2]

    # Layer 1: column concat.  column k*h1 + j <-> cluster k, unit j.
    w1p = jnp.transpose(w1, (1, 0, 2)).reshape(n_z, n_y * h1)
    b1p = b1.reshape(1, n_y * h1)

    # Layer 2: block-diagonal (exact because ReLU is elementwise).
    eye = jnp.eye(n_y, dtype=w2.dtype)
    w2p = jnp.einsum("kij,kl->kilj", w2, eye).reshape(n_y * h1, n_y * h2)
    b2p = b2.reshape(1, n_y * h2)

    # Layer 3: vertical stack (dense), lane-padded; y-mixture applied in kernel.
    w3s = jnp.pad(w3.reshape(n_y * h2, n_x), ((0, 0), (0, n_x_pad - n_x)))
    b3s = jnp.pad(b3, ((0, 0), (0, n_x_pad - n_x)))          # [n_y, n_x_pad]

    return (w1p.astype(jnp.bfloat16), b1p.astype(jnp.float32),
            w2p.astype(jnp.bfloat16), b2p.astype(jnp.float32),
            w3s.astype(jnp.bfloat16), b3s.astype(jnp.float32))


def latent_decoder_multi(z, y, params, out_shape):
    """p(x|z) logits for the 'multi' LatentDecoder.

    z: [B, n_z] f32, y: [B, n_y] f32.
    params: dict of stacked per-cluster MLP weights (see _pack_params).
    Returns logits reshaped to [B] + out_shape.
    """
    B, n_z = z.shape
    n_y = y.shape[1]
    h1 = params["w1"].shape[2]
    h2 = params["w2"].shape[2]
    n_x = params["w3"].shape[2]
    n_x_pad = max(128, ((n_x + 127) // 128) * 128)   # lane-dense output slab

    w1p, b1p, w2p, b2p, w3s, b3s = _pack_params(params, n_x_pad)

    # Cluster-expansion matrix for the mixture: E2[k, k*h2:(k+1)*h2] = 1.
    e2 = jnp.asarray(np.kron(np.eye(n_y, dtype=np.float32),
                             np.ones((1, h2), np.float32)))   # [n_y, n_y*h2]

    # Batch tiling: bounded tile (<= 512 rows, sublane-rounded); pad B up to a
    # tile multiple so bt never falls back to the full batch. Large batches get
    # multiple "parallel" grid steps (pipelining + v7x megacore sharding).
    bt = min(512, ((B + 7) // 8) * 8)
    B_pad = ((B + bt - 1) // bt) * bt
    nb = B_pad // bt
    if B_pad != B:
        z = jnp.pad(z, ((0, B_pad - B), (0, 0)))
        y = jnp.pad(y, ((0, B_pad - B), (0, 0)))
    z = z.astype(jnp.bfloat16)   # bf16 MXU operand (weights already bf16)

    flops = 2 * B_pad * (n_z * (n_y * h1)
                         + (n_y * h1) * (n_y * h2)
                         + n_y * (n_y * h2)
                         + (n_y * h2) * n_x_pad
                         + n_y * n_x_pad)
    bytes_accessed = (B_pad * n_z * 2 + B_pad * n_y * 4 + B_pad * n_x_pad * 4
                      + n_z * (n_y * h1) * 2 + (n_y * h1) * 4
                      + (n_y * h1) * (n_y * h2) * 2 + (n_y * h2) * 4
                      + (n_y * h2) * n_x_pad * 2 + n_y * n_x_pad * 4
                      + n_y * (n_y * h2) * 4)

    padded = pl.pallas_call(
        _latent_decoder_kernel,
        out_shape=jax.ShapeDtypeStruct((B_pad, n_x_pad), jnp.float32),
        grid_spec=pltpu.PrefetchScalarGridSpec(
            num_scalar_prefetch=0,
            grid=(nb,),
            in_specs=[
                pl.BlockSpec((bt, n_z), lambda i: (i, 0)),
                pl.BlockSpec((bt, n_y), lambda i: (i, 0)),
                pl.BlockSpec((n_z, n_y * h1), lambda i: (0, 0)),
                pl.BlockSpec((1, n_y * h1), lambda i: (0, 0)),
                pl.BlockSpec((n_y * h1, n_y * h2), lambda i: (0, 0)),
                pl.BlockSpec((1, n_y * h2), lambda i: (0, 0)),
                pl.BlockSpec((n_y * h2, n_x_pad), lambda i: (0, 0)),
                pl.BlockSpec((n_y, n_x_pad), lambda i: (0, 0)),
                pl.BlockSpec((n_y, n_y * h2), lambda i: (0, 0)),
            ],
            out_specs=pl.BlockSpec((bt, n_x_pad), lambda i: (i, 0)),
        ),
        compiler_params=pltpu.CompilerParams(
            dimension_semantics=("parallel",)),
        cost_estimate=pl.CostEstimate(flops=flops, transcendentals=0,
                                      bytes_accessed=bytes_accessed),
    )(z, y, w1p, b1p, w2p, b2p, w3s, b3s, e2)

    # Module contract: [B] + out_shape. Under a larger jit this slice/reshape
    # fuses with the consumer; consumers that can take the padded [B, n_x_pad]
    # slab directly should do so to skip the extra HBM pass.
    return padded[:B, :n_x].reshape([B] + list(out_shape))


def _reference(z, y, params, out_shape):
    """Pure-JAX f32 reference mirroring the PyTorch forward (for verification)."""
    def one_cluster(w1, b1, w2, b2, w3, b3):
        h = jnp.maximum(z @ w1 + b1, 0.0)
        h = jnp.maximum(h @ w2 + b2, 0.0)
        return h @ w3 + b3                               # [B, n_x]

    all_logits = jax.vmap(one_cluster)(params["w1"], params["b1"],
                                       params["w2"], params["b2"],
                                       params["w3"], params["b3"])  # [n_y, B, n_x]
    logits = jnp.einsum("ij,jik->ik", y, all_logits)
    return logits.reshape([z.shape[0]] + list(out_shape))


if __name__ == "__main__":
    # Small shapes consistent with the module's forward:
    #   z: [B, n_z], y: [B, n_y], out_shape = [8, 8, 1] -> n_x = 64
    B, n_z, n_y = 8, 16, 4
    n_dec = [32, 64]
    out_shape = [8, 8, 1]
    n_x = int(np.prod(out_shape))

    key = jax.random.PRNGKey(0)
    ks = jax.random.split(key, 9)

    z = jax.random.normal(ks[0], (B, n_z), dtype=jnp.float32)
    y_logits = jax.random.normal(ks[1], (B, n_y), dtype=jnp.float32)
    y = jax.nn.softmax(y_logits, axis=-1)                 # categorical cluster weights

    # Deterministic synthetic MLP parameters (stacked over the n_y clusters).
    params = {
        "w1": 0.1 * jax.random.normal(ks[2], (n_y, n_z, n_dec[0]), dtype=jnp.float32),
        "b1": 0.1 * jax.random.normal(ks[3], (n_y, n_dec[0]), dtype=jnp.float32),
        "w2": 0.1 * jax.random.normal(ks[4], (n_y, n_dec[0], n_dec[1]), dtype=jnp.float32),
        "b2": 0.1 * jax.random.normal(ks[5], (n_y, n_dec[1]), dtype=jnp.float32),
        "w3": 0.1 * jax.random.normal(ks[6], (n_y, n_dec[1], n_x), dtype=jnp.float32),
        "b3": 0.1 * jax.random.normal(ks[7], (n_y, n_x), dtype=jnp.float32),
    }

    run = jax.jit(functools.partial(latent_decoder_multi, out_shape=out_shape))
    logits = run(z, y, params)
    logits = jax.block_until_ready(logits)

    ref = _reference(z, y, params, out_shape)
    assert logits.shape == tuple([B] + out_shape), logits.shape
    # Tolerance accounts for bf16 MXU operands (f32 accumulation); observed
    # end-to-end error is ~1e-3 at these scales.
    err = float(jnp.max(jnp.abs(logits - ref)))
    assert jnp.allclose(logits, ref, atol=2e-2, rtol=2e-2), err

    print("KERNEL_OK")
</pallas_src>

<mosaic_0001>
module attributes {stable_mosaic.version = 11 : i64} {
  func.func @_latent_decoder_kernel(%arg0: i32, %arg1: memref<8x16xbf16, #tpu.memory_space<vmem>>, %arg2: memref<8x4xf32, #tpu.memory_space<vmem>>, %arg3: memref<16x128xbf16, #tpu.memory_space<vmem>>, %arg4: memref<1x128xf32, #tpu.memory_space<vmem>>, %arg5: memref<128x256xbf16, #tpu.memory_space<vmem>>, %arg6: memref<1x256xf32, #tpu.memory_space<vmem>>, %arg7: memref<256x128xbf16, #tpu.memory_space<vmem>>, %arg8: memref<4x128xf32, #tpu.memory_space<vmem>>, %arg9: memref<4x256xf32, #tpu.memory_space<vmem>>, %arg10: memref<8x128xf32, #tpu.memory_space<vmem>>) attributes {dimension_semantics = [#tpu.dimension_semantics<parallel>], iteration_bounds = array<i64: 1>, scalar_prefetch = 0 : i64, scratch_operands = 0 : i64, tpu.core_type = #tpu.core_type<tc>, window_params = [{transform_indices = @transform_0, window_bounds = array<i64: 8, 16>}, {transform_indices = @transform_1, window_bounds = array<i64: 8, 4>}, {pipeline_mode = #tpu.pipeline_mode<synchronous>, transform_indices = @transform_2, window_bounds = array<i64: 16, 128>}, {pipeline_mode = #tpu.pipeline_mode<synchronous>, transform_indices = @transform_3, window_bounds = array<i64: 1, 128>}, {pipeline_mode = #tpu.pipeline_mode<synchronous>, transform_indices = @transform_4, window_bounds = array<i64: 128, 256>}, {pipeline_mode = #tpu.pipeline_mode<synchronous>, transform_indices = @transform_5, window_bounds = array<i64: 1, 256>}, {pipeline_mode = #tpu.pipeline_mode<synchronous>, transform_indices = @transform_6, window_bounds = array<i64: 256, 128>}, {pipeline_mode = #tpu.pipeline_mode<synchronous>, transform_indices = @transform_7, window_bounds = array<i64: 4, 128>}, {pipeline_mode = #tpu.pipeline_mode<synchronous>, transform_indices = @transform_8, window_bounds = array<i64: 4, 256>}, {transform_indices = @transform_9, window_bounds = array<i64: 8, 128>}]} {
    %c0 = arith.constant 0 : index
    %c0_0 = arith.constant 0 : index
    %0 = vector.load %arg1[%c0, %c0_0] : memref<8x16xbf16, #tpu.memory_space<vmem>>, vector<8x16xbf16>
    %c0_1 = arith.constant 0 : index
    %c0_2 = arith.constant 0 : index
    %1 = vector.load %arg3[%c0_1, %c0_2] : memref<16x128xbf16, #tpu.memory_space<vmem>>, vector<16x128xbf16>
    %cst = arith.constant dense<0.000000e+00> : vector<8x128xf32>
    %2 = tpu.matmul %0, %1, %cst {dimension_numbers = #tpu.dot_dimension_numbers<[1], [0], [0], [1], [0, 0, 1, 1], [], []>} : vector<8x16xbf16>, vector<16x128xbf16>, vector<8x128xf32> -> vector<8x128xf32>
    %c0_3 = arith.constant 0 : index
    %c0_4 = arith.constant 0 : index
    %3 = vector.load %arg4[%c0_3, %c0_4] : memref<1x128xf32, #tpu.memory_space<vmem>>, vector<1x128xf32>
    %4 = vector.broadcast %3 : vector<1x128xf32> to vector<8x128xf32>
    %5 = arith.addf %2, %4 : vector<8x128xf32>
    %cst_5 = arith.constant 0.000000e+00 : f32
    %6 = vector.broadcast %cst_5 : f32 to vector<8x128xf32>
    %7 = arith.maximumf %5, %6 : vector<8x128xf32>
    %8 = arith.truncf %7 : vector<8x128xf32> to vector<8x128xbf16>
    %c0_6 = arith.constant 0 : index
    %c0_7 = arith.constant 0 : index
    %9 = vector.load %arg5[%c0_6, %c0_7] : memref<128x256xbf16, #tpu.memory_space<vmem>>, vector<128x256xbf16>
    %cst_8 = arith.constant dense<0.000000e+00> : vector<8x256xf32>
    %10 = tpu.matmul %8, %9, %cst_8 {dimension_numbers = #tpu.dot_dimension_numbers<[1], [0], [0], [1], [0, 0, 1, 1], [], []>} : vector<8x128xbf16>, vector<128x256xbf16>, vector<8x256xf32> -> vector<8x256xf32>
    %c0_9 = arith.constant 0 : index
    %c0_10 = arith.constant 0 : index
    %11 = vector.load %arg6[%c0_9, %c0_10] : memref<1x256xf32, #tpu.memory_space<vmem>>, vector<1x256xf32>
    %12 = vector.broadcast %11 : vector<1x256xf32> to vector<8x256xf32>
    %13 = arith.addf %10, %12 : vector<8x256xf32>
    %cst_11 = arith.constant 0.000000e+00 : f32
    %14 = vector.broadcast %cst_11 : f32 to vector<8x256xf32>
    %15 = arith.maximumf %13, %14 : vector<8x256xf32>
    %c0_12 = arith.constant 0 : index
    %c0_13 = arith.constant 0 : index
    %16 = vector.load %arg2[%c0_12, %c0_13] : memref<8x4xf32, #tpu.memory_space<vmem>>, vector<8x4xf32>
    %c0_14 = arith.constant 0 : index
    %c0_15 = arith.constant 0 : index
    %17 = vector.load %arg9[%c0_14, %c0_15] : memref<4x256xf32, #tpu.memory_space<vmem>>, vector<4x256xf32>
    %cst_16 = arith.constant dense<0.000000e+00> : vector<8x256xf32>
    %18 = tpu.matmul %16, %17, %cst_16 {dimension_numbers = #tpu.dot_dimension_numbers<[1], [0], [0], [1], [0, 0, 1, 1], [], []>} : vector<8x4xf32>, vector<4x256xf32>, vector<8x256xf32> -> vector<8x256xf32>
    %19 = arith.mulf %15, %18 : vector<8x256xf32>
    %20 = arith.truncf %19 : vector<8x256xf32> to vector<8x256xbf16>
    %c0_17 = arith.constant 0 : index
    %c0_18 = arith.constant 0 : index
    %21 = vector.load %arg7[%c0_17, %c0_18] : memref<256x128xbf16, #tpu.memory_space<vmem>>, vector<256x128xbf16>
    %cst_19 = arith.constant dense<0.000000e+00> : vector<8x128xf32>
    %22 = tpu.matmul %20, %21, %cst_19 {dimension_numbers = #tpu.dot_dimension_numbers<[1], [0], [0], [1], [0, 0, 1, 1], [], []>} : vector<8x256xbf16>, vector<256x128xbf16>, vector<8x128xf32> -> vector<8x128xf32>
    %c0_20 = arith.constant 0 : index
    %c0_21 = arith.constant 0 : index
    %23 = vector.load %arg2[%c0_20, %c0_21] : memref<8x4xf32, #tpu.memory_space<vmem>>, vector<8x4xf32>
    %c0_22 = arith.constant 0 : index
    %c0_23 = arith.constant 0 : index
    %24 = vector.load %arg8[%c0_22, %c0_23] : memref<4x128xf32, #tpu.memory_space<vmem>>, vector<4x128xf32>
    %cst_24 = arith.constant dense<0.000000e+00> : vector<8x128xf32>
    %25 = tpu.matmul %23, %24, %cst_24 {dimension_numbers = #tpu.dot_dimension_numbers<[1], [0], [0], [1], [0, 0, 1, 1], [], []>} : vector<8x4xf32>, vector<4x128xf32>, vector<8x128xf32> -> vector<8x128xf32>
    %26 = arith.addf %22, %25 : vector<8x128xf32>
    %c0_25 = arith.constant 0 : index
    %c0_26 = arith.constant 0 : index
    %27 = vector.load %arg10[%c0_25, %c0_26] : memref<8x128xf32, #tpu.memory_space<vmem>>, vector<8x128xf32>
    tpu.vector_store %arg10[%c0_25, %c0_26], %26 {strides = array<i32>} : memref<8x128xf32, #tpu.memory_space<vmem>>, vector<8x128xf32>,
    return
  }
  func.func @transform_0(%arg0: i32) -> (i32, i32) {
    %c0_i32 = arith.constant 0 : i32
    %c0_i32_0 = arith.constant 0 : i32
    return %arg0, %c0_i32 : i32, i32
  }
  func.func @transform_1(%arg0: i32) -> (i32, i32) {
    %c0_i32 = arith.constant 0 : i32
    %c0_i32_0 = arith.constant 0 : i32
    return %arg0, %c0_i32 : i32, i32
  }
  func.func @transform_2(%arg0: i32) -> (i32, i32) {
    %c0_i32 = arith.constant 0 : i32
    %c0_i32_0 = arith.constant 0 : i32
    %c0_i32_1 = arith.constant 0 : i32
    return %c0_i32, %c0_i32_0 : i32, i32
  }
  func.func @transform_3(%arg0: i32) -> (i32, i32) {
    %c0_i32 = arith.constant 0 : i32
    %c0_i32_0 = arith.constant 0 : i32
    %c0_i32_1 = arith.constant 0 : i32
    return %c0_i32, %c0_i32_0 : i32, i32
  }
  func.func @transform_4(%arg0: i32) -> (i32, i32) {
    %c0_i32 = arith.constant 0 : i32
    %c0_i32_0 = arith.constant 0 : i32
    %c0_i32_1 = arith.constant 0 : i32
    return %c0_i32, %c0_i32_0 : i32, i32
  }
  func.func @transform_5(%arg0: i32) -> (i32, i32) {
    %c0_i32 = arith.constant 0 : i32
    %c0_i32_0 = arith.constant 0 : i32
    %c0_i32_1 = arith.constant 0 : i32
    return %c0_i32, %c0_i32_0 : i32, i32
  }
  func.func @transform_6(%arg0: i32) -> (i32, i32) {
    %c0_i32 = arith.constant 0 : i32
    %c0_i32_0 = arith.constant 0 : i32
    %c0_i32_1 = arith.constant 0 : i32
    return %c0_i32, %c0_i32_0 : i32, i32
  }
  func.func @transform_7(%arg0: i32) -> (i32, i32) {
    %c0_i32 = arith.constant 0 : i32
    %c0_i32_0 = arith.constant 0 : i32
    %c0_i32_1 = arith.constant 0 : i32
    return %c0_i32, %c0_i32_0 : i32, i32
  }
  func.func @transform_8(%arg0: i32) -> (i32, i32) {
    %c0_i32 = arith.constant 0 : i32
    %c0_i32_0 = arith.constant 0 : i32
    %c0_i32_1 = arith.constant 0 : i32
    return %c0_i32, %c0_i32_0 : i32, i32
  }
  func.func @transform_9(%arg0: i32) -> (i32, i32) {
    %c0_i32 = arith.constant 0 : i32
    %c0_i32_0 = arith.constant 0 : i32
    return %arg0, %c0_i32 : i32, i32
  }
}

</mosaic_0001>

<llo_original>
// kernel: latent_decoder_multi.1
$region0: #{latent_decoder_multi.1}
  #allocation0 [shape = 'u32[]', space=smem, size = 0x4, offset = 0x4, fixed_abs, tag = 'smem constant byte address 0x4 - core index']
  #allocation1 [shape = 'u32[144,128]{1,0:T(1,128)}', space=vmem, size = 0x12000, scoped, tag = 'internal scratch']
  %s0 = inlined_call_operand.vmem [shape: bf16[8,16], index: 0, kind: input, shape index: {}]
  %s1 = inlined_call_operand.vmem [shape: f32[8,4], index: 1, kind: input, shape index: {}]
  %s2 = inlined_call_operand.vmem [shape: bf16[16,128], index: 2, kind: input, shape index: {}]
  %s3 = inlined_call_operand.vmem [shape: f32[1,128], index: 3, kind: input, shape index: {}]
  %s4 = inlined_call_operand.vmem [shape: bf16[128,256], index: 4, kind: input, shape index: {}]
  %s5 = inlined_call_operand.vmem [shape: f32[1,256], index: 5, kind: input, shape index: {}]
  %s6 = inlined_call_operand.vmem [shape: bf16[256,128], index: 6, kind: input, shape index: {}]
  %s7 = inlined_call_operand.vmem [shape: f32[4,128], index: 7, kind: input, shape index: {}]
  %s8 = inlined_call_operand.vmem [shape: f32[4,256], index: 8, kind: input, shape index: {}]
  %s9 = inlined_call_operand.vmem [shape: f32[8,128], index: 9, kind: output, shape index: {}]
  %s10 = sld [smem:[#allocation0]]
  $region46: #{latent_decoder_multi.1} parent=0
    _
  %s12 = ssub.s32 1, %s10
  %s13 = scalar_select 0, %s12, %s10
  // Predicated region
  $region2: #{latent_decoder_multi.1} parent=0 // pred_check
    _
  $region3: #{latent_decoder_multi.1} parent=0 // pred_check_branch
    %15 = sbr.rel (0) target = $region5
  $region4: #{latent_decoder_multi.1} parent=0 // pred_region
    _
  $region5: #{latent_decoder_multi.1} parent=0 // pred_fallthru
    _
  // Predicated region
  $region6: #{latent_decoder_multi.1} parent=0 // pred_check
    _
  $region7: #{latent_decoder_multi.1} parent=0 // pred_check_branch
    %17 = sbr.rel (0) target = $region9
  $region8: #{latent_decoder_multi.1} parent=0 // pred_region
    _
  $region9: #{latent_decoder_multi.1} parent=0 // pred_fallthru
    _
  // Predicated region
  $region10: #{latent_decoder_multi.1} parent=0 // pred_check
    _
  $region11: #{latent_decoder_multi.1} parent=0 // pred_check_branch
    %19 = sbr.rel (0) target = $region13
  $region12: #{latent_decoder_multi.1} parent=0 // pred_region
    _
  $region13: #{latent_decoder_multi.1} parent=0 // pred_fallthru
    _
  // Predicated region
  $region14: #{latent_decoder_multi.1} parent=0 // pred_check
    _
  $region15: #{latent_decoder_multi.1} parent=0 // pred_check_branch
    %21 = sbr.rel (0) target = $region17
  $region16: #{latent_decoder_multi.1} parent=0 // pred_region
    _
  $region17: #{latent_decoder_multi.1} parent=0 // pred_fallthru
    _
  // Predicated region
  $region18: #{latent_decoder_multi.1} parent=0 // pred_check
    _
  $region19: #{latent_decoder_multi.1} parent=0 // pred_check_branch
    %23 = sbr.rel (0) target = $region21
  $region20: #{latent_decoder_multi.1} parent=0 // pred_region
    _
  $region21: #{latent_decoder_multi.1} parent=0 // pred_fallthru
    _
  // Predicated region
  $region22: #{latent_decoder_multi.1} parent=0 // pred_check
    _
  $region23: #{latent_decoder_multi.1} parent=0 // pred_check_branch
    %25 = sbr.rel (0) target = $region25
  $region24: #{latent_decoder_multi.1} parent=0 // pred_region
    _
  $region25: #{latent_decoder_multi.1} parent=0 // pred_fallthru
    _
  // Predicated region
  $region26: #{latent_decoder_multi.1} parent=0 // pred_check
    _
  $region27: #{latent_decoder_multi.1} parent=0 // pred_check_branch
    %27 = sbr.rel (0) target = $region29
  $region28: #{latent_decoder_multi.1} parent=0 // pred_region
    _
  $region29: #{latent_decoder_multi.1} parent=0 // pred_fallthru
    _
  // Predicated region
  $region30: #{latent_decoder_multi.1} parent=0 // pred_check
    _
  $region31: #{latent_decoder_multi.1} parent=0 // pred_check_branch
    %29 = sbr.rel (0) target = $region33
  $region32: #{latent_decoder_multi.1} parent=0 // pred_region
    _
  $region33: #{latent_decoder_multi.1} parent=0 // pred_fallthru
    _
  // Predicated region
  $region34: #{latent_decoder_multi.1} parent=0 // pred_check
    _
  $region35: #{latent_decoder_multi.1} parent=0 // pred_check_branch
    %31 = sbr.rel (0) target = $region37
  $region36: #{latent_decoder_multi.1} parent=0 // pred_region
    _
  $region37: #{latent_decoder_multi.1} parent=0 // pred_fallthru
    _
  %v33 = vld [vmem:[%s0] sm:$0xf]
  %v34 = vld [vmem:[%s2] sm:$0xf]
  %v35 = vld [vmem:[%s2 + $0x4] sm:$0xf]
  %v36 = vld [vmem:[%s3] sm:$0x1]
  %v38 = vlaneseq
  %v39 = vshrl.u32 %v38, 7
  %v40 = vsub.s32 0, %v39
  %v41 = vrot.slane %v36, %v40
  %v45 = vunpack.c.l.b16 %v34
  %v46 = vunpack.c.l.b16 %v35
  %v47 = vpack.c.b16 %v46, %v45
  %vm49 = vcmask 130048
  %v51 = vsel %vm49, %v33, 0
  %53 = vmatprep.subr.bf16.mxu0 0
  %54 = vmatpush1.bf16.msra.mxu0 0
  %55 = vmatprep.subr.bf16.mxu0 0
  %56 = vmatpush1.bf16.msra.mxu0 0
  %57 = vmatprep.subr.bf16.mxu0 0
  %58 = vmatpush1.bf16.msra.mxu0 0
  %59 = vmatprep.subr.bf16.mxu0 0
  %60 = vmatpush1.bf16.msra.mxu0 0
  %61 = vmatprep.subr.bf16.mxu0 0
  %62 = vmatpush1.bf16.msra.mxu0 0
  %63 = vmatprep.subr.bf16.mxu0 0
  %64 = vmatpush1.bf16.msra.mxu0 0
  %65 = vmatprep.subr.bf16.mxu0 0
  %66 = vmatpush1.bf16.msra.mxu0 0
  %67 = vmatprep.subr.bf16.mxu0 0
  %68 = vmatpush1.bf16.msra.mxu0 %v47
  %69 = vmatprep.subr.bf16.mxu0 0
  %70 = vmatpush2.bf16.msra.mxu0 0
  %71 = vmatprep.subr.bf16.mxu0 0
  %72 = vmatpush2.bf16.msra.mxu0 0
  %73 = vmatprep.subr.bf16.mxu0 0
  %74 = vmatpush2.bf16.msra.mxu0 0
  %75 = vmatprep.subr.bf16.mxu0 0
  %76 = vmatpush2.bf16.msra.mxu0 0
  %77 = vmatprep.subr.bf16.mxu0 0
  %78 = vmatpush2.bf16.msra.mxu0 0
  %79 = vmatprep.subr.bf16.mxu0 0
  %80 = vmatpush2.bf16.msra.mxu0 0
  %81 = vmatprep.subr.bf16.mxu0 0
  %82 = vmatpush2.bf16.msra.mxu0 0
  %83 = vmatprep.subr.bf16.mxu0 0
  %84 = vmatpush2.bf16.msra.mxu0 0
  %85 = vmatprep.mubr.bf16.mxu0 0
  %86 = vmatmul.mubr.bf16.gmra.mxu0 %v51
  %v87 = vpop.f32.mrf.mxu0
  %v88 = vadd.f32 %v41, %v87
  %v89 = vpop.f32.mrf.mxu0
  %v90 = vpop.f32.mrf.mxu0
  %v91 = vpop.f32.mrf.mxu0
  %92 = vdwg.mxu0
  %v93 = vmax.f32 %v88, 0.0
  %v94 = vpack.c.bf16 %v93, %v93
  %v95 = vld [vmem:[%s4] sm:$0xff]
  %v96 = vld [vmem:[%s4 + $0x8] sm:$0xff]
  %v97 = vld [vmem:[%s4 + $0x10] sm:$0xff]
  %v98 = vld [vmem:[%s4 + $0x18] sm:$0xff]
  %v99 = vld [vmem:[%s4 + $0x20] sm:$0xff]
  %v100 = vld [vmem:[%s4 + $0x28] sm:$0xff]
  %v101 = vld [vmem:[%s4 + $0x30] sm:$0xff]
  %v102 = vld [vmem:[%s4 + $0x38] sm:$0xff]
  %v103 = vld [vmem:[%s4 + $0x40] sm:$0xff]
  %v104 = vld [vmem:[%s4 + $0x48] sm:$0xff]
  %v105 = vld [vmem:[%s4 + $0x50] sm:$0xff]
  %v106 = vld [vmem:[%s4 + $0x58] sm:$0xff]
  %v107 = vld [vmem:[%s4 + $0x60] sm:$0xff]
  %v108 = vld [vmem:[%s4 + $0x68] sm:$0xff]
  %v109 = vld [vmem:[%s4 + $0x70] sm:$0xff]
  %v110 = vld [vmem:[%s4 + $0x78] sm:$0xff]
  %v111 = vld [vmem:[%s5] sm:$0x3]
  %v113 = vlaneseq
  %v114 = vshrl.u32 %v113, 7
  %v115 = vsub.s32 0, %v114
  %v116 = vrot.slane %v111, %v115
  %v117 = vlaneseq
  %v118 = vshrl.u32 %v117, 7
  %v119 = vsub.s32 1, %v118
  %v120 = vrot.slane %v111, %v119
  %v139 = vunpack.c.l.b16 %v95
  %v140 = vunpack.c.h.b16 %v95
  %v141 = vunpack.c.l.b16 %v96
  %v142 = vunpack.c.h.b16 %v96
  %v143 = vunpack.c.l.b16 %v97
  %v144 = vunpack.c.h.b16 %v97
  %v145 = vunpack.c.l.b16 %v98
  %v146 = vunpack.c.h.b16 %v98
  %v147 = vunpack.c.l.b16 %v99
  %v148 = vunpack.c.h.b16 %v99
  %v149 = vunpack.c.l.b16 %v100
  %v150 = vunpack.c.h.b16 %v100
  %v151 = vunpack.c.l.b16 %v101
  %v152 = vunpack.c.h.b16 %v101
  %v153 = vunpack.c.l.b16 %v102
  %v154 = vunpack.c.h.b16 %v102
  %v155 = vunpack.c.l.b16 %v103
  %v156 = vunpack.c.h.b16 %v103
  %v157 = vunpack.c.l.b16 %v104
  %v158 = vunpack.c.h.b16 %v104
  %v159 = vunpack.c.l.b16 %v105
  %v160 = vunpack.c.h.b16 %v105
  %v161 = vunpack.c.l.b16 %v106
  %v162 = vunpack.c.h.b16 %v106
  %v163 = vunpack.c.l.b16 %v107
  %v164 = vunpack.c.h.b16 %v107
  %v165 = vunpack.c.l.b16 %v108
  %v166 = vunpack.c.h.b16 %v108
  %v167 = vunpack.c.l.b16 %v109
  %v168 = vunpack.c.h.b16 %v109
  %v169 = vunpack.c.l.b16 %v110
  %v170 = vunpack.c.h.b16 %v110
  %v171 = vpack.c.b16 %v141, %v139
  %v172 = vpack.c.b16 %v142, %v140
  %v173 = vpack.c.b16 %v145, %v143
  %v174 = vpack.c.b16 %v146, %v144
  %v175 = vpack.c.b16 %v149, %v147
  %v176 = vpack.c.b16 %v150, %v148
  %v177 = vpack.c.b16 %v153, %v151
  %v178 = vpack.c.b16 %v154, %v152
  %v179 = vpack.c.b16 %v157, %v155
  %v180 = vpack.c.b16 %v158, %v156
  %v181 = vpack.c.b16 %v161, %v159
  %v182 = vpack.c.b16 %v162, %v160
  %v183 = vpack.c.b16 %v165, %v163
  %v184 = vpack.c.b16 %v166, %v164
  %v185 = vpack.c.b16 %v169, %v167
  %v186 = vpack.c.b16 %v170, %v168
  %203 = vmatprep.subr.bf16.mxu0 %v186
  %204 = vmatpush1.bf16.msra.mxu0 %v185
  %205 = vmatprep.subr.bf16.mxu0 %v184
  %206 = vmatpush1.bf16.msra.mxu0 %v183
  %207 = vmatprep.subr.bf16.mxu0 %v182
  %208 = vmatpush1.bf16.msra.mxu0 %v181
  %209 = vmatprep.subr.bf16.mxu0 %v180
  %210 = vmatpush1.bf16.msra.mxu0 %v179
  %211 = vmatprep.subr.bf16.mxu0 %v178
  %212 = vmatpush1.bf16.msra.mxu0 %v177
  %213 = vmatprep.subr.bf16.mxu0 %v176
  %214 = vmatpush1.bf16.msra.mxu0 %v175
  %215 = vmatprep.subr.bf16.mxu0 %v174
  %216 = vmatpush1.bf16.msra.mxu0 %v173
  %217 = vmatprep.subr.bf16.mxu0 %v172
  %218 = vmatpush1.bf16.msra.mxu0 %v171
  %219 = vmatprep.subr.bf16.mxu0 0
  %220 = vmatpush2.bf16.msra.mxu0 0
  %221 = vmatprep.subr.bf16.mxu0 0
  %222 = vmatpush2.bf16.msra.mxu0 0
  %223 = vmatprep.subr.bf16.mxu0 0
  %224 = vmatpush2.bf16.msra.mxu0 0
  %225 = vmatprep.subr.bf16.mxu0 0
  %226 = vmatpush2.bf16.msra.mxu0 0
  %227 = vmatprep.subr.bf16.mxu0 0
  %228 = vmatpush2.bf16.msra.mxu0 0
  %229 = vmatprep.subr.bf16.mxu0 0
  %230 = vmatpush2.bf16.msra.mxu0 0
  %231 = vmatprep.subr.bf16.mxu0 0
  %232 = vmatpush2.bf16.msra.mxu0 0
  %233 = vmatprep.subr.bf16.mxu0 0
  %234 = vmatpush2.bf16.msra.mxu0 0
  %235 = vmatprep.mubr.bf16.mxu0 0
  %236 = vmatmul.mubr.bf16.gmra.mxu0 %v94
  %v237 = vpop.f32.mrf.mxu0
  %v238 = vadd.f32 %v116, %v237
  %v239 = vpop.f32.mrf.mxu0
  %v240 = vadd.f32 %v120, %v239
  %v241 = vpop.f32.mrf.mxu0
  %v242 = vpop.f32.mrf.mxu0
  %243 = vdwg.mxu0
  %v244 = vmax.f32 %v238, 0.0
  %v245 = vmax.f32 %v240, 0.0
  %v246 = vld [vmem:[%s1] sm:$0xff]
  %v247 = vld [vmem:[%s8] sm:$0xff]
  %v249 = vcombine.high %v247, %v247
  %vm250 = vcmask 31744
  %v252 = vsel %vm250, %v246, 0
  %vm254 = vcmask 1043456
  %v255 = vsel %vm254, %v247, 0
  %v257 = vsel %vm254, %v249, 0
  %259 = vmatprep.subr.mxu0 0.0
  %260 = vmatpush1.msra.mxu0 0.0
  %261 = vmatprep.subr.mxu0 0.0
  %262 = vmatpush1.msra.mxu0 0.0
  %263 = vmatprep.subr.mxu0 0.0
  %264 = vmatpush1.msra.mxu0 0.0
  %265 = vmatprep.subr.mxu0 0.0
  %266 = vmatpush1.msra.mxu0 0.0
  %267 = vmatprep.subr.mxu0 0.0
  %268 = vmatpush1.msra.mxu0 0.0
  %269 = vmatprep.subr.mxu0 0.0
  %270 = vmatpush1.msra.mxu0 0.0
  %271 = vmatprep.subr.mxu0 0.0
  %272 = vmatpush1.msra.mxu0 0.0
  %273 = vmatprep.subr.mxu0 0.0
  %274 = vmatpush1.msra.mxu0 0.0
  %275 = vmatprep.subr.mxu0 0.0
  %276 = vmatpush1.msra.mxu0 0.0
  %277 = vmatprep.subr.mxu0 0.0
  %278 = vmatpush1.msra.mxu0 0.0
  %279 = vmatprep.subr.mxu0 0.0
  %280 = vmatpush1.msra.mxu0 0.0
  %281 = vmatprep.subr.mxu0 0.0
  %282 = vmatpush1.msra.mxu0 0.0
  %283 = vmatprep.subr.mxu0 0.0
  %284 = vmatpush1.msra.mxu0 0.0
  %285 = vmatprep.subr.mxu0 0.0
  %286 = vmatpush1.msra.mxu0 0.0
  %287 = vmatprep.subr.mxu0 0.0
  %288 = vmatpush1.msra.mxu0 0.0
  %289 = vmatprep.subr.mxu0 %v257
  %290 = vmatpush1.msra.mxu0 %v255
  %291 = vmatprep.subr.mxu0 0.0
  %292 = vmatpush2.msra.mxu0 0.0
  %293 = vmatprep.subr.mxu0 0.0
  %294 = vmatpush2.msra.mxu0 0.0
  %295 = vmatprep.subr.mxu0 0.0
  %296 = vmatpush2.msra.mxu0 0.0
  %297 = vmatprep.subr.mxu0 0.0
  %298 = vmatpush2.msra.mxu0 0.0
  %299 = vmatprep.subr.mxu0 0.0
  %300 = vmatpush2.msra.mxu0 0.0
  %301 = vmatprep.subr.mxu0 0.0
  %302 = vmatpush2.msra.mxu0 0.0
  %303 = vmatprep.subr.mxu0 0.0
  %304 = vmatpush2.msra.mxu0 0.0
  %305 = vmatprep.subr.mxu0 0.0
  %306 = vmatpush2.msra.mxu0 0.0
  %307 = vmatprep.subr.mxu0 0.0
  %308 = vmatpush2.msra.mxu0 0.0
  %309 = vmatprep.subr.mxu0 0.0
  %310 = vmatpush2.msra.mxu0 0.0
  %311 = vmatprep.subr.mxu0 0.0
  %312 = vmatpush2.msra.mxu0 0.0
  %313 = vmatprep.subr.mxu0 0.0
  %314 = vmatpush2.msra.mxu0 0.0
  %315 = vmatprep.subr.mxu0 0.0
  %316 = vmatpush2.msra.mxu0 0.0
  %317 = vmatprep.subr.mxu0 0.0
  %318 = vmatpush2.msra.mxu0 0.0
  %319 = vmatprep.subr.mxu0 0.0
  %320 = vmatpush2.msra.mxu0 0.0
  %321 = vmatprep.subr.mxu0 0.0
  %322 = vmatpush2.msra.mxu0 0.0
  %323 = vmatprep.mubr.f32.mxu0 0.0
  %324 = vmatmul.mubr.f32.gmra.mxu0 %v252
  %v325 = vpop.f32.mrf.mxu0
  %v326 = vadd.f32 0.0, %v325
  %v327 = vpop.f32.mrf.mxu0
  %v328 = vadd.f32 0.0, %v327
  %329 = vdwg.mxu0
  %v330 = vmul.f32 %v244, %v326
  %v331 = vmul.f32 %v245, %v328
  %v332 = vpack.c.bf16 %v330, %v330
  %v333 = vpack.c.bf16 %v331, %v331
  %v334 = vld [vmem:[%s6] sm:$0xf]
  %v335 = vld [vmem:[%s6 + $0x4] sm:$0xf]
  %v336 = vld [vmem:[%s6 + $0x8] sm:$0xf]
  %v337 = vld [vmem:[%s6 + $0xc] sm:$0xf]
  %v338 = vld [vmem:[%s6 + $0x10] sm:$0xf]
  %v339 = vld [vmem:[%s6 + $0x14] sm:$0xf]
  %v340 = vld [vmem:[%s6 + $0x18] sm:$0xf]
  %v341 = vld [vmem:[%s6 + $0x1c] sm:$0xf]
  %v342 = vld [vmem:[%s6 + $0x20] sm:$0xf]
  %v343 = vld [vmem:[%s6 + $0x24] sm:$0xf]
  %v344 = vld [vmem:[%s6 + $0x28] sm:$0xf]
  %v345 = vld [vmem:[%s6 + $0x2c] sm:$0xf]
  %v346 = vld [vmem:[%s6 + $0x30] sm:$0xf]
  %v347 = vld [vmem:[%s6 + $0x34] sm:$0xf]
  %v348 = vld [vmem:[%s6 + $0x38] sm:$0xf]
  %v349 = vld [vmem:[%s6 + $0x3c] sm:$0xf]
  %v350 = vld [vmem:[%s6 + $0x40] sm:$0xf]
  %v351 = vld [vmem:[%s6 + $0x44] sm:$0xf]
  %v352 = vld [vmem:[%s6 + $0x48] sm:$0xf]
  %v353 = vld [vmem:[%s6 + $0x4c] sm:$0xf]
  %v354 = vld [vmem:[%s6 + $0x50] sm:$0xf]
  %v355 = vld [vmem:[%s6 + $0x54] sm:$0xf]
  %v356 = vld [vmem:[%s6 + $0x58] sm:$0xf]
  %v357 = vld [vmem:[%s6 + $0x5c] sm:$0xf]
  %v358 = vld [vmem:[%s6 + $0x60] sm:$0xf]
  %v359 = vld [vmem:[%s6 + $0x64] sm:$0xf]
  %v360 = vld [vmem:[%s6 + $0x68] sm:$0xf]
  %v361 = vld [vmem:[%s6 + $0x6c] sm:$0xf]
  %v362 = vld [vmem:[%s6 + $0x70] sm:$0xf]
  %v363 = vld [vmem:[%s6 + $0x74] sm:$0xf]
  %v364 = vld [vmem:[%s6 + $0x78] sm:$0xf]
  %v365 = vld [vmem:[%s6 + $0x7c] sm:$0xf]
  %v366 = vld [vmem:[%s7] sm:$0xf]
  %v368 = vsel %vm254, %v366, 0
  %370 = vmatprep.subr.mxu0 0.0
  %371 = vmatpush1.msra.mxu0 0.0
  %372 = vmatprep.subr.mxu0 0.0
  %373 = vmatpush1.msra.mxu0 0.0
  %374 = vmatprep.subr.mxu0 0.0
  %375 = vmatpush1.msra.mxu0 0.0
  %376 = vmatprep.subr.mxu0 0.0
  %377 = vmatpush1.msra.mxu0 0.0
  %378 = vmatprep.subr.mxu0 0.0
  %379 = vmatpush1.msra.mxu0 0.0
  %380 = vmatprep.subr.mxu0 0.0
  %381 = vmatpush1.msra.mxu0 0.0
  %382 = vmatprep.subr.mxu0 0.0
  %383 = vmatpush1.msra.mxu0 0.0
  %384 = vmatprep.subr.mxu0 0.0
  %385 = vmatpush1.msra.mxu0 0.0
  %386 = vmatprep.subr.mxu0 0.0
  %387 = vmatpush1.msra.mxu0 0.0
  %388 = vmatprep.subr.mxu0 0.0
  %389 = vmatpush1.msra.mxu0 0.0
  %390 = vmatprep.subr.mxu0 0.0
  %391 = vmatpush1.msra.mxu0 0.0
  %392 = vmatprep.subr.mxu0 0.0
  %393 = vmatpush1.msra.mxu0 0.0
  %394 = vmatprep.subr.mxu0 0.0
  %395 = vmatpush1.msra.mxu0 0.0
  %396 = vmatprep.subr.mxu0 0.0
  %397 = vmatpush1.msra.mxu0 0.0
  %398 = vmatprep.subr.mxu0 0.0
  %399 = vmatpush1.msra.mxu0 0.0
  %400 = vmatprep.subr.mxu0 0.0
  %401 = vmatpush1.msra.mxu0 %v368
  %402 = vmatprep.subr.mxu0 0.0
  %403 = vmatpush2.msra.mxu0 0.0
  %404 = vmatprep.subr.mxu0 0.0
  %405 = vmatpush2.msra.mxu0 0.0
  %406 = vmatprep.subr.mxu0 0.0
  %407 = vmatpush2.msra.mxu0 0.0
  %408 = vmatprep.subr.mxu0 0.0
  %409 = vmatpush2.msra.mxu0 0.0
  %410 = vmatprep.subr.mxu0 0.0
  %411 = vmatpush2.msra.mxu0 0.0
  %412 = vmatprep.subr.mxu0 0.0
  %413 = vmatpush2.msra.mxu0 0.0
  %414 = vmatprep.subr.mxu0 0.0
  %415 = vmatpush2.msra.mxu0 0.0
  %416 = vmatprep.subr.mxu0 0.0
  %417 = vmatpush2.msra.mxu0 0.0
  %418 = vmatprep.subr.mxu0 0.0
  %419 = vmatpush2.msra.mxu0 0.0
  %420 = vmatprep.subr.mxu0 0.0
  %421 = vmatpush2.msra.mxu0 0.0
  %422 = vmatprep.subr.mxu0 0.0
  %423 = vmatpush2.msra.mxu0 0.0
  %424 = vmatprep.subr.mxu0 0.0
  %425 = vmatpush2.msra.mxu0 0.0
  %426 = vmatprep.subr.mxu0 0.0
  %427 = vmatpush2.msra.mxu0 0.0
  %428 = vmatprep.subr.mxu0 0.0
  %429 = vmatpush2.msra.mxu0 0.0
  %430 = vmatprep.subr.mxu0 0.0
  %431 = vmatpush2.msra.mxu0 0.0
  %432 = vmatprep.subr.mxu0 0.0
  %433 = vmatpush2.msra.mxu0 0.0
  %434 = vmatprep.mubr.f32.mxu0 0.0
  %435 = vmatmul.mubr.f32.gmra.mxu0 %v252
  %v436 = vpop.f32.mrf.mxu0
  %v437 = vadd.f32 0.0, %v436
  %v438 = vpop.f32.mrf.mxu0
  %439 = vdwg.mxu0
  %v472 = vunpack.c.l.b16 %v334
  %v473 = vunpack.c.l.b16 %v335
  %v474 = vunpack.c.l.b16 %v336
  %v475 = vunpack.c.l.b16 %v337
  %v476 = vunpack.c.l.b16 %v338
  %v477 = vunpack.c.l.b16 %v339
  %v478 = vunpack.c.l.b16 %v340
  %v479 = vunpack.c.l.b16 %v341
  %v480 = vunpack.c.l.b16 %v342
  %v481 = vunpack.c.l.b16 %v343
  %v482 = vunpack.c.l.b16 %v344
  %v483 = vunpack.c.l.b16 %v345
  %v484 = vunpack.c.l.b16 %v346
  %v485 = vunpack.c.l.b16 %v347
  %v486 = vunpack.c.l.b16 %v348
  %v487 = vunpack.c.l.b16 %v349
  %v488 = vunpack.c.l.b16 %v350
  %v489 = vunpack.c.l.b16 %v351
  %v490 = vunpack.c.l.b16 %v352
  %v491 = vunpack.c.l.b16 %v353
  %v492 = vunpack.c.l.b16 %v354
  %v493 = vunpack.c.l.b16 %v355
  %v494 = vunpack.c.l.b16 %v356
  %v495 = vunpack.c.l.b16 %v357
  %v496 = vunpack.c.l.b16 %v358
  %v497 = vunpack.c.l.b16 %v359
  %v498 = vunpack.c.l.b16 %v360
  %v499 = vunpack.c.l.b16 %v361
  %v500 = vunpack.c.l.b16 %v362
  %v501 = vunpack.c.l.b16 %v363
  %v502 = vunpack.c.l.b16 %v364
  %v503 = vunpack.c.l.b16 %v365
  %v504 = vpack.c.b16 %v473, %v472
  %v505 = vpack.c.b16 %v475, %v474
  %v506 = vpack.c.b16 %v477, %v476
  %v507 = vpack.c.b16 %v479, %v478
  %v508 = vpack.c.b16 %v481, %v480
  %v509 = vpack.c.b16 %v483, %v482
  %v510 = vpack.c.b16 %v485, %v484
  %v511 = vpack.c.b16 %v487, %v486
  %v512 = vpack.c.b16 %v489, %v488
  %v513 = vpack.c.b16 %v491, %v490
  %v514 = vpack.c.b16 %v493, %v492
  %v515 = vpack.c.b16 %v495, %v494
  %v516 = vpack.c.b16 %v497, %v496
  %v517 = vpack.c.b16 %v499, %v498
  %v518 = vpack.c.b16 %v501, %v500
  %v519 = vpack.c.b16 %v503, %v502
  %536 = vmatprep.subr.bf16.mxu0 0
  %537 = vmatpush1.bf16.msra.mxu0 %v511
  %538 = vmatprep.subr.bf16.mxu0 0
  %539 = vmatpush1.bf16.msra.mxu0 %v510
  %540 = vmatprep.subr.bf16.mxu0 0
  %541 = vmatpush1.bf16.msra.mxu0 %v509
  %542 = vmatprep.subr.bf16.mxu0 0
  %543 = vmatpush1.bf16.msra.mxu0 %v508
  %544 = vmatprep.subr.bf16.mxu0 0
  %545 = vmatpush1.bf16.msra.mxu0 %v507
  %546 = vmatprep.subr.bf16.mxu0 0
  %547 = vmatpush1.bf16.msra.mxu0 %v506
  %548 = vmatprep.subr.bf16.mxu0 0
  %549 = vmatpush1.bf16.msra.mxu0 %v505
  %550 = vmatprep.subr.bf16.mxu0 0
  %551 = vmatpush1.bf16.msra.mxu0 %v504
  %552 = vmatprep.subr.bf16.mxu0 0
  %553 = vmatpush2.bf16.msra.mxu0 %v519
  %554 = vmatprep.subr.bf16.mxu0 0
  %555 = vmatpush2.bf16.msra.mxu0 %v518
  %556 = vmatprep.subr.bf16.mxu0 0
  %557 = vmatpush2.bf16.msra.mxu0 %v517
  %558 = vmatprep.subr.bf16.mxu0 0
  %559 = vmatpush2.bf16.msra.mxu0 %v516
  %560 = vmatprep.subr.bf16.mxu0 0
  %561 = vmatpush2.bf16.msra.mxu0 %v515
  %562 = vmatprep.subr.bf16.mxu0 0
  %563 = vmatpush2.bf16.msra.mxu0 %v514
  %564 = vmatprep.subr.bf16.mxu0 0
  %565 = vmatpush2.bf16.msra.mxu0 %v513
  %566 = vmatprep.subr.bf16.mxu0 0
  %567 = vmatpush2.bf16.msra.mxu0 %v512
  %568 = vmatprep.mubr.bf16.mxu0 %v333
  %569 = vmatmul.mubr.bf16.gmra.mxu0 %v332
  %v570 = vpop.f32.mrf.mxu0
  %v571 = vadd.f32 %v437, %v570
  %v572 = vpop.f32.mrf.mxu0
  %v573 = vpop.f32.mrf.mxu0
  %v574 = vpop.f32.mrf.mxu0
  %575 = vdwg.mxu0
  %576 = vst [vmem:[%s9] sm:$0xff] %v571
  // Predicated region
  $region38: #{latent_decoder_multi.1} parent=0 // pred_check
    _
  $region39: #{latent_decoder_multi.1} parent=0 // pred_check_branch
    %578 = sbr.rel (0) target = $region41
  $region40: #{latent_decoder_multi.1} parent=0 // pred_region
    _
  $region41: #{latent_decoder_multi.1} parent=0 // pred_fallthru
    _
  // Predicated region
  $region42: #{latent_decoder_multi.1} parent=0 // pred_check
    _
  $region43: #{latent_decoder_multi.1} parent=0 // pred_check_branch
    %580 = sbr.rel (0) target = $region45
  $region44: #{latent_decoder_multi.1} parent=0 // pred_region
    _
  $region45: #{latent_decoder_multi.1} parent=0 // pred_fallthru
    _

</llo_original>
